<compile_context>
chip_gen: v6e
topology: v6e:2x2x1
jax: 0.10.0
libtpu: 0.0.40
codegen_flags: <defaults>
</compile_context>

<pallas_src>
import functools

import jax
import jax.numpy as jnp
from jax.experimental import pallas as pl
from jax.experimental.pallas import tpu as pltpu

LANES = 128
SUBLANES = 8
MAX_ROW_TILE = 2048  # 2048 x 128 f32 = 1 MiB per input per pipeline buffer


def _poly_loss_kernel(x_ref, y_ref, out_ref, *, degree, row_tile, n_elems,
                      need_mask):
    x = x_ref[...].astype(jnp.float32)
    y = y_ref[...].astype(jnp.float32)
    d = x - y
    ay = jnp.abs(y)

    # Specialize the power at trace time (degree is a static Python value).
    if float(degree) == 2.0:
        p = d * d                                  # |d|^2 without the abs
    elif float(degree).is_integer() and int(degree) >= 1:
        ad = jnp.abs(d)
        p = ad
        for _ in range(int(degree) - 1):
            p = p * ad
    else:
        p = jnp.abs(d) ** jnp.float32(degree)
    term = p * ay

    if need_mask:
        # Mask out lane-padding / grid-tail elements (int32 element indices:
        # exact for tensors with fewer than 2**31 elements).
        i = pl.program_id(0)
        row = jax.lax.broadcasted_iota(jnp.int32, (row_tile, LANES), 0)
        lane = jax.lax.broadcasted_iota(jnp.int32, (row_tile, LANES), 1)
        elem = (i * row_tile + row) * LANES + lane
        term = jnp.where(elem < n_elems, term, jnp.float32(0.0))

    # Fold the (row_tile, 128) tile into an (8, 128) partial sum.  The reshape
    # is vreg/layout-preserving and the axis-0 sum is pure VPU adds.
    folded = jnp.sum(term.reshape(row_tile // SUBLANES, SUBLANES, LANES),
                     axis=0)
    out_ref[...] = folded[None, :, :]


@functools.partial(jax.jit, static_argnames=("degree",))
def weighted_poly_loss(x, y, degree=2):
    """mean(|x - y|**degree * |y|), computed with a Pallas TPU kernel."""
    assert x.shape == y.shape, "x and y must have the same shape"
    n_elems = x.size

    # Dtype-aware sublane quantum (sub-32-bit dtypes pack along sublanes).
    itemsize = min(jnp.dtype(x.dtype).itemsize, jnp.dtype(y.dtype).itemsize)
    packing = max(1, 4 // int(itemsize))
    sublane_quantum = SUBLANES * packing       # 8 f32 / 16 bf16 / 32 int8
    block_quantum = sublane_quantum * LANES

    padded = pl.cdiv(n_elems, block_quantum) * block_quantum
    pad = padded - n_elems

    xf = x.reshape(-1)
    yf = y.reshape(-1)
    if pad:
        # Only taken when numel % block_quantum != 0; padded values are masked
        # in-kernel so they never contribute (safe for any degree).
        # TODO(synk): for very large ragged tensors, process the tail in a
        # second tiny call instead of materializing a padded copy.
        xf = jnp.pad(xf, (0, pad))
        yf = jnp.pad(yf, (0, pad))

    rows = padded // LANES                     # multiple of sublane_quantum
    row_tile = min(MAX_ROW_TILE, rows)         # multiple of sublane_quantum
    grid_n = pl.cdiv(rows, row_tile)
    need_mask = (pad != 0) or (rows % row_tile != 0)

    x2d = xf.reshape(rows, LANES)
    y2d = yf.reshape(rows, LANES)

    bytes_accessed = (x2d.size * x2d.dtype.itemsize
                      + y2d.size * y2d.dtype.itemsize
                      + grid_n * SUBLANES * LANES * 4)

    partials = pl.pallas_call(
        functools.partial(
            _poly_loss_kernel,
            degree=degree,
            row_tile=row_tile,
            n_elems=n_elems,
            need_mask=need_mask,
        ),
        out_shape=jax.ShapeDtypeStruct((grid_n, SUBLANES, LANES), jnp.float32),
        grid=(grid_n,),
        in_specs=[
            pl.BlockSpec((row_tile, LANES), lambda i: (i, 0)),
            pl.BlockSpec((row_tile, LANES), lambda i: (i, 0)),
        ],
        out_specs=pl.BlockSpec((1, SUBLANES, LANES), lambda i: (i, 0, 0)),
        compiler_params=pltpu.CompilerParams(
            dimension_semantics=("parallel",),
        ),
        cost_estimate=pl.CostEstimate(
            flops=6 * n_elems, transcendentals=0,
            bytes_accessed=bytes_accessed),
    )(x2d, y2d)

    # Tiny tree-reduce of the per-block partials + mean normalization in JAX.
    return jnp.sum(partials) / jnp.float32(n_elems)


if __name__ == "__main__":
    key = jax.random.PRNGKey(0)
    kx, ky = jax.random.split(key)
    # Small shapes consistent with an image-regression loss: NCHW.
    x = jax.random.normal(kx, (2, 4, 16, 16), dtype=jnp.float32)
    y = jax.random.normal(ky, (2, 4, 16, 16), dtype=jnp.float32)

    loss = weighted_poly_loss(x, y, degree=2)
    loss = jax.block_until_ready(loss)

    # Pure-JAX reference check.
    ref = jnp.mean(jnp.abs(x - y) ** 2 * jnp.abs(y))
    assert jnp.allclose(loss, ref, rtol=1e-5, atol=1e-6), (loss, ref)

    print("KERNEL_OK")
</pallas_src>

<mosaic_0001>
module attributes {stable_mosaic.version = 11 : i64} {
  func.func @_poly_loss_kernel(%arg0: i32, %arg1: memref<16x128xf32, #tpu.memory_space<vmem>>, %arg2: memref<16x128xf32, #tpu.memory_space<vmem>>, %arg3: memref<1x8x128xf32, #tpu.memory_space<vmem>>) attributes {dimension_semantics = [#tpu.dimension_semantics<parallel>], iteration_bounds = array<i64: 1>, scalar_prefetch = 0 : i64, scratch_operands = 0 : i64, tpu.core_type = #tpu.core_type<tc>, window_params = [{transform_indices = @transform_0, window_bounds = array<i64: 16, 128>}, {transform_indices = @transform_1, window_bounds = array<i64: 16, 128>}, {transform_indices = @transform_2, window_bounds = array<i64: 1, 8, 128>}]} {
    %c0 = arith.constant 0 : index
    %c0_0 = arith.constant 0 : index
    %0 = vector.load %arg1[%c0, %c0_0] : memref<16x128xf32, #tpu.memory_space<vmem>>, vector<16x128xf32>
    %c0_1 = arith.constant 0 : index
    %c0_2 = arith.constant 0 : index
    %1 = vector.load %arg2[%c0_1, %c0_2] : memref<16x128xf32, #tpu.memory_space<vmem>>, vector<16x128xf32>
    %2 = arith.subf %0, %1 : vector<16x128xf32>
    %3 = math.absf %1 : vector<16x128xf32>
    %4 = arith.mulf %2, %2 : vector<16x128xf32>
    %5 = arith.mulf %4, %3 : vector<16x128xf32>
    %6 = vector.shape_cast %5 : vector<16x128xf32> to vector<2x8x128xf32>
    %cst = arith.constant dense<0.000000e+00> : vector<8x128xf32>
    %7 = vector.multi_reduction <add>, %6, %cst [0] : vector<2x8x128xf32> to vector<8x128xf32>
    %8 = vector.shape_cast %7 : vector<8x128xf32> to vector<1x8x128xf32>
    %c0_3 = arith.constant 0 : index
    %c0_4 = arith.constant 0 : index
    %c0_5 = arith.constant 0 : index
    %9 = vector.load %arg3[%c0_3, %c0_4, %c0_5] : memref<1x8x128xf32, #tpu.memory_space<vmem>>, vector<1x8x128xf32>
    tpu.vector_store %arg3[%c0_3, %c0_4, %c0_5], %8 {strides = array<i32>} : memref<1x8x128xf32, #tpu.memory_space<vmem>>, vector<1x8x128xf32>,
    return
  }
  func.func @transform_0(%arg0: i32) -> (i32, i32) {
    %c0_i32 = arith.constant 0 : i32
    %c0_i32_0 = arith.constant 0 : i32
    return %arg0, %c0_i32 : i32, i32
  }
  func.func @transform_1(%arg0: i32) -> (i32, i32) {
    %c0_i32 = arith.constant 0 : i32
    %c0_i32_0 = arith.constant 0 : i32
    return %arg0, %c0_i32 : i32, i32
  }
  func.func @transform_2(%arg0: i32) -> (i32, i32, i32) {
    %c0_i32 = arith.constant 0 : i32
    %c0_i32_0 = arith.constant 0 : i32
    %c0_i32_1 = arith.constant 0 : i32
    return %arg0, %c0_i32, %c0_i32_0 : i32, i32, i32
  }
}

</mosaic_0001>

<llo_original>
// kernel: weighted_poly_loss.1
$region0: #{weighted_poly_loss.1}
  #allocation0 [shape = 'u32[]', space=smem, size = 0x4, offset = 0x4, fixed_abs, tag = 'smem constant byte address 0x4 - core index']
  #allocation1 [shape = 'u32[144,128]{1,0:T(1,128)}', space=vmem, size = 0x12000, scoped, tag = 'internal scratch']
  %s0 = inlined_call_operand.vmem [shape: f32[16,128], index: 0, kind: input, shape index: {}]
  %s1 = inlined_call_operand.vmem [shape: f32[16,128], index: 1, kind: input, shape index: {}]
  %s2 = inlined_call_operand.vmem [shape: f32[1,8,128], index: 2, kind: output, shape index: {}]
  %s3 = sld [smem:[#allocation0]]
  $region18: #{weighted_poly_loss.1} parent=0
    _
  %s5 = ssub.s32 1, %s3
  %s6 = scalar_select 0, %s5, %s3
  // Predicated region
  $region2: #{weighted_poly_loss.1} parent=0 // pred_check
    _
  $region3: #{weighted_poly_loss.1} parent=0 // pred_check_branch
    %8 = sbr.rel (0) target = $region5
  $region4: #{weighted_poly_loss.1} parent=0 // pred_region
    _
  $region5: #{weighted_poly_loss.1} parent=0 // pred_fallthru
    _
  // Predicated region
  $region6: #{weighted_poly_loss.1} parent=0 // pred_check
    _
  $region7: #{weighted_poly_loss.1} parent=0 // pred_check_branch
    %10 = sbr.rel (0) target = $region9
  $region8: #{weighted_poly_loss.1} parent=0 // pred_region
    _
  $region9: #{weighted_poly_loss.1} parent=0 // pred_fallthru
    _
  %v11 = vld [vmem:[%s0] sm:$0xff]
  %v12 = vld [vmem:[%s0 + $0x8] sm:$0xff]
  %v13 = vld [vmem:[%s1] sm:$0xff]
  %v14 = vld [vmem:[%s1 + $0x8] sm:$0xff]
  %v15 = vsub.f32 %v11, %v13
  %v16 = vsub.f32 %v12, %v14
  %v17 = vand.u32 2147483647, %v13
  %v18 = vand.u32 2147483647, %v14
  %v19 = vmul.f32 %v15, %v15
  %v20 = vmul.f32 %v16, %v16
  %v21 = vmul.f32 %v19, %v17
  %v22 = vmul.f32 %v20, %v18
  %v23 = vadd.f32 %v21, %v22
  %24 = vst [vmem:[%s2] sm:$0xff] %v23
  // Predicated region
  $region10: #{weighted_poly_loss.1} parent=0 // pred_check
    _
  $region11: #{weighted_poly_loss.1} parent=0 // pred_check_branch
    %26 = sbr.rel (0) target = $region13
  $region12: #{weighted_poly_loss.1} parent=0 // pred_region
    _
  $region13: #{weighted_poly_loss.1} parent=0 // pred_fallthru
    _
  // Predicated region
  $region14: #{weighted_poly_loss.1} parent=0 // pred_check
    _
  $region15: #{weighted_poly_loss.1} parent=0 // pred_check_branch
    %28 = sbr.rel (0) target = $region17
  $region16: #{weighted_poly_loss.1} parent=0 // pred_region
    _
  $region17: #{weighted_poly_loss.1} parent=0 // pred_fallthru
    _

</llo_original>
